<compile_context>
chip_gen: v6e
topology: v6e:2x2x1
jax: 0.10.0
libtpu: 0.0.40
codegen_flags: <defaults>
</compile_context>

<pallas_src>
import jax
import jax.numpy as jnp
from jax.experimental import pallas as pl
from jax.experimental.pallas import tpu as pltpu

EPS = 1e-5
LANES = 128


def _round_up(x, m):
    return ((x + m - 1) // m) * m


def _vmem_policy():
    """(vmem_limit_bytes, live_data_budget_bytes), generation-aware but safe."""
    cap = None
    try:
        cap = int(getattr(pltpu.get_tpu_info(), "vmem_capacity_bytes", 0)) or None
    except Exception:
        cap = None
    if cap is not None and cap >= 96 * 1024 * 1024:
        # v5e / v6e: 128 MiB VMEM per TensorCore -> let tiles grow.
        return 96 * 1024 * 1024, 48 * 1024 * 1024
    # v7x (64 MiB per TC) or unknown: stay conservative.
    return 40 * 1024 * 1024, 16 * 1024 * 1024


def _num_tensorcores():
    """Two TensorCores per chip only on v7x among the targeted generations."""
    try:
        kind = jax.devices()[0].device_kind.lower()
    except Exception:
        return 1
    return 2 if "v7" in kind else 1


def _pick_tile_rows(rows, row_elems, itemsize, budget_bytes, num_tc):
    """Largest sublane-aligned row tile that fits the VMEM live-data budget."""
    # Double-buffered input + output at their dtype, plus ~3 f32 full-width temps.
    per_row = 2 * 2 * row_elems * itemsize + 3 * row_elems * 4
    tile = budget_bytes // max(per_row, 1)
    tile = min(tile, 8192)  # per-step cap (~4 MiB f32 at 128 lanes)
    if num_tc > 1:
        # Keep >= 2*num_tc grid steps so both TensorCores get balanced work.
        tile = min(tile, max(8, pl.cdiv(rows, 2 * num_tc)))
    if tile >= rows:
        return int(rows)  # single step; block == full array dim is always legal
    tile = max(8, (tile // 8) * 8)  # sublane multiple
    if num_tc > 1:
        steps = pl.cdiv(rows, tile)
        if steps % num_tc:  # prefer an even number of steps on multi-TC chips
            steps = _round_up(steps, num_tc)
            tile = max(8, _round_up(pl.cdiv(rows, steps), 8))
            if tile >= rows:
                return int(rows)
    return int(tile)


def _layernorm_rows_kernel(x_ref, scale_ref, shift_ref, o_ref):
    # x_ref: (tile_rows, emb_dim); scale_ref/shift_ref: (1, emb_dim).
    x = x_ref[...].astype(jnp.float32)
    inv_d = jnp.float32(1.0 / x.shape[-1])
    mean = jnp.sum(x, axis=-1, keepdims=True) * inv_d          # XLU reduce
    xc = x - mean
    var = jnp.sum(xc * xc, axis=-1, keepdims=True) * inv_d     # two-pass variance
    inv_std = jax.lax.rsqrt(var + EPS)                          # EUP
    a = inv_std * scale_ref[...].astype(jnp.float32)
    o_ref[...] = (xc * a + shift_ref[...].astype(jnp.float32)).astype(o_ref.dtype)


def _layernorm_packed_kernel(x_ref, scale_ref, shift_ref, seg_ref, o_ref):
    # x_ref: (tile_rows, 128) holding `pack = 128 // emb_dim` logical rows per row.
    # seg_ref: (128, 128) block-diagonal matrix filled with 1/emb_dim, so x @ seg
    # is the per-segment mean already broadcast across each segment's lanes
    # (reduce + scale + broadcast ride the otherwise-idle MXU).
    x = x_ref[...].astype(jnp.float32)
    seg = seg_ref[...]
    mean = jnp.dot(x, seg, preferred_element_type=jnp.float32)
    xc = x - mean
    var = jnp.dot(xc * xc, seg, preferred_element_type=jnp.float32)
    inv_std = jax.lax.rsqrt(var + EPS)
    a = inv_std * scale_ref[...].astype(jnp.float32)
    o_ref[...] = (xc * a + shift_ref[...].astype(jnp.float32)).astype(o_ref.dtype)


def _segment_matrix(emb_dim, packed_dim):
    ids = jnp.arange(packed_dim) // emb_dim
    return jnp.where(ids[:, None] == ids[None, :],
                     jnp.float32(1.0 / emb_dim), jnp.float32(0.0))


def layer_norm(x, scale, shift):
    orig_shape = x.shape
    emb_dim = orig_shape[-1]
    x2 = x.reshape(-1, emb_dim)  # free row-major view
    rows = x2.shape[0]
    itemsize = jnp.dtype(x.dtype).itemsize
    vmem_limit, vmem_budget = _vmem_policy()
    num_tc = _num_tensorcores()
    compiler_params = pltpu.CompilerParams(
        dimension_semantics=("parallel",),
        vmem_limit_bytes=vmem_limit,
    )

    pack = LANES // emb_dim if (emb_dim < LANES and LANES % emb_dim == 0) else 1
    if pack > 1:
        # ---- lane-dense packed path (e.g. emb_dim=32 -> 4 rows per 128-lane row) ----
        pad = (-rows) % pack
        if pad:
            # Cheap row pad keeps every row on the 4x-faster lane-dense store path.
            x2 = jnp.pad(x2, ((0, pad), (0, 0)))
        packed_dim = pack * emb_dim                      # == 128
        rows_p = (rows + pad) // pack
        xp = x2.reshape(rows_p, packed_dim)              # free reshape
        scale_p = jnp.tile(scale.reshape(1, emb_dim), (1, pack))
        shift_p = jnp.tile(shift.reshape(1, emb_dim), (1, pack))
        seg = _segment_matrix(emb_dim, packed_dim)

        tile_rows = _pick_tile_rows(rows_p, packed_dim, itemsize, vmem_budget, num_tc)
        grid = (pl.cdiv(rows_p, tile_rows),)
        out = pl.pallas_call(
            _layernorm_packed_kernel,
            out_shape=jax.ShapeDtypeStruct((rows_p, packed_dim), x.dtype),
            grid_spec=pltpu.PrefetchScalarGridSpec(
                num_scalar_prefetch=0,
                grid=grid,
                in_specs=[
                    pl.BlockSpec((tile_rows, packed_dim), lambda i: (i, 0)),
                    pl.BlockSpec((1, packed_dim), lambda i: (0, 0)),
                    pl.BlockSpec((1, packed_dim), lambda i: (0, 0)),
                    pl.BlockSpec((packed_dim, packed_dim), lambda i: (0, 0)),
                ],
                out_specs=pl.BlockSpec((tile_rows, packed_dim), lambda i: (i, 0)),
            ),
            compiler_params=compiler_params,
        )(xp, scale_p, shift_p, seg)
        out = out.reshape(-1, emb_dim)
        if pad:
            out = out[:rows]
        return out.reshape(orig_shape)

    # ---- general path (emb_dim >= 128 or 128 % emb_dim != 0) ----
    # Note: when emb_dim % 128 != 0 the last vreg column stores are masked; padding
    # emb would add HBM traffic, so we accept the modest penalty here.
    tile_rows = _pick_tile_rows(rows, emb_dim, itemsize, vmem_budget, num_tc)
    grid = (pl.cdiv(rows, tile_rows),)
    out = pl.pallas_call(
        _layernorm_rows_kernel,
        out_shape=jax.ShapeDtypeStruct((rows, emb_dim), x.dtype),
        grid_spec=pltpu.PrefetchScalarGridSpec(
            num_scalar_prefetch=0,
            grid=grid,
            in_specs=[
                pl.BlockSpec((tile_rows, emb_dim), lambda i: (i, 0)),
                pl.BlockSpec((1, emb_dim), lambda i: (0, 0)),
                pl.BlockSpec((1, emb_dim), lambda i: (0, 0)),
            ],
            out_specs=pl.BlockSpec((tile_rows, emb_dim), lambda i: (i, 0)),
        ),
        compiler_params=compiler_params,
    )(x2, scale.reshape(1, emb_dim), shift.reshape(1, emb_dim))
    return out.reshape(orig_shape)


def _reference(x, scale, shift):
    mean = x.mean(axis=-1, keepdims=True)
    var = ((x - mean) ** 2).mean(axis=-1, keepdims=True)
    return scale * ((x - mean) / jnp.sqrt(var + EPS)) + shift


if __name__ == "__main__":
    # Shapes implied by the module: x = (batch, seq, emb_dim), emb_dim = 32.
    batch, seq, emb_dim = 2, 8, 32
    x = jax.random.normal(jax.random.PRNGKey(0), (batch, seq, emb_dim), dtype=jnp.float32)
    scale = jnp.ones((emb_dim,), dtype=jnp.float32)   # matches nn.Parameter(ones)
    shift = jnp.zeros((emb_dim,), dtype=jnp.float32)  # matches nn.Parameter(zeros)

    out = jax.block_until_ready(layer_norm(x, scale, shift))
    ref = _reference(x, scale, shift)
    assert jnp.allclose(out, ref, atol=1e-4, rtol=1e-4), "mismatch (packed path)"

    # Packed path with a row-count that is NOT a multiple of pack (exercises padding).
    x_odd = jax.random.normal(jax.random.PRNGKey(4), (3, 5, emb_dim), dtype=jnp.float32)
    out_odd = jax.block_until_ready(layer_norm(x_odd, scale, shift))
    ref_odd = _reference(x_odd, scale, shift)
    assert jnp.allclose(out_odd, ref_odd, atol=1e-4, rtol=1e-4), "mismatch (padded packed path)"

    # General lane-dense path (emb_dim >= 128) with non-trivial affine params.
    emb2 = 256
    x2 = jax.random.normal(jax.random.PRNGKey(1), (batch, seq, emb2), dtype=jnp.float32)
    s2 = jax.random.normal(jax.random.PRNGKey(2), (emb2,), dtype=jnp.float32)
    b2 = jax.random.normal(jax.random.PRNGKey(3), (emb2,), dtype=jnp.float32)
    out2 = jax.block_until_ready(layer_norm(x2, s2, b2))
    ref2 = _reference(x2, s2, b2)
    assert jnp.allclose(out2, ref2, atol=1e-4, rtol=1e-4), "mismatch (rows path)"

    print("KERNEL_OK")
</pallas_src>

<mosaic_0001>
module attributes {stable_mosaic.version = 11 : i64} {
  func.func @_layernorm_packed_kernel(%arg0: i32, %arg1: memref<4x128xf32, #tpu.memory_space<vmem>>, %arg2: memref<1x128xf32, #tpu.memory_space<vmem>>, %arg3: memref<1x128xf32, #tpu.memory_space<vmem>>, %arg4: memref<128x128xf32, #tpu.memory_space<vmem>>, %arg5: memref<4x128xf32, #tpu.memory_space<vmem>>) attributes {dimension_semantics = [#tpu.dimension_semantics<parallel>], iteration_bounds = array<i64: 1>, scalar_prefetch = 0 : i64, scratch_operands = 0 : i64, tpu.core_type = #tpu.core_type<tc>, window_params = [{transform_indices = @transform_0, window_bounds = array<i64: 4, 128>}, {pipeline_mode = #tpu.pipeline_mode<synchronous>, transform_indices = @transform_1, window_bounds = array<i64: 1, 128>}, {pipeline_mode = #tpu.pipeline_mode<synchronous>, transform_indices = @transform_2, window_bounds = array<i64: 1, 128>}, {pipeline_mode = #tpu.pipeline_mode<synchronous>, transform_indices = @transform_3, window_bounds = array<i64: 128, 128>}, {transform_indices = @transform_4, window_bounds = array<i64: 4, 128>}]} {
    %c0 = arith.constant 0 : index
    %c0_0 = arith.constant 0 : index
    %0 = vector.load %arg1[%c0, %c0_0] : memref<4x128xf32, #tpu.memory_space<vmem>>, vector<4x128xf32>
    %c0_1 = arith.constant 0 : index
    %c0_2 = arith.constant 0 : index
    %1 = vector.load %arg4[%c0_1, %c0_2] : memref<128x128xf32, #tpu.memory_space<vmem>>, vector<128x128xf32>
    %cst = arith.constant dense<0.000000e+00> : vector<4x128xf32>
    %2 = tpu.matmul %0, %1, %cst {dimension_numbers = #tpu.dot_dimension_numbers<[1], [0], [0], [1], [0, 0, 1, 1], [], []>} : vector<4x128xf32>, vector<128x128xf32>, vector<4x128xf32> -> vector<4x128xf32>
    %3 = arith.subf %0, %2 : vector<4x128xf32>
    %4 = arith.mulf %3, %3 : vector<4x128xf32>
    %cst_3 = arith.constant dense<0.000000e+00> : vector<4x128xf32>
    %5 = tpu.matmul %4, %1, %cst_3 {dimension_numbers = #tpu.dot_dimension_numbers<[1], [0], [0], [1], [0, 0, 1, 1], [], []>} : vector<4x128xf32>, vector<128x128xf32>, vector<4x128xf32> -> vector<4x128xf32>
    %cst_4 = arith.constant 9.99999974E-6 : f32
    %6 = vector.broadcast %cst_4 : f32 to vector<4x128xf32>
    %7 = arith.addf %5, %6 : vector<4x128xf32>
    %8 = math.rsqrt %7 : vector<4x128xf32>
    %c0_5 = arith.constant 0 : index
    %c0_6 = arith.constant 0 : index
    %9 = vector.load %arg2[%c0_5, %c0_6] : memref<1x128xf32, #tpu.memory_space<vmem>>, vector<1x128xf32>
    %10 = vector.broadcast %9 : vector<1x128xf32> to vector<4x128xf32>
    %11 = arith.mulf %8, %10 : vector<4x128xf32>
    %12 = arith.mulf %3, %11 : vector<4x128xf32>
    %c0_7 = arith.constant 0 : index
    %c0_8 = arith.constant 0 : index
    %13 = vector.load %arg3[%c0_7, %c0_8] : memref<1x128xf32, #tpu.memory_space<vmem>>, vector<1x128xf32>
    %14 = vector.broadcast %13 : vector<1x128xf32> to vector<4x128xf32>
    %15 = arith.addf %12, %14 : vector<4x128xf32>
    %c0_9 = arith.constant 0 : index
    %c0_10 = arith.constant 0 : index
    %16 = vector.load %arg5[%c0_9, %c0_10] : memref<4x128xf32, #tpu.memory_space<vmem>>, vector<4x128xf32>
    tpu.vector_store %arg5[%c0_9, %c0_10], %15 {strides = array<i32>} : memref<4x128xf32, #tpu.memory_space<vmem>>, vector<4x128xf32>,
    return
  }
  func.func @transform_0(%arg0: i32) -> (i32, i32) {
    %c0_i32 = arith.constant 0 : i32
    %c0_i32_0 = arith.constant 0 : i32
    return %arg0, %c0_i32 : i32, i32
  }
  func.func @transform_1(%arg0: i32) -> (i32, i32) {
    %c0_i32 = arith.constant 0 : i32
    %c0_i32_0 = arith.constant 0 : i32
    %c0_i32_1 = arith.constant 0 : i32
    return %c0_i32, %c0_i32_0 : i32, i32
  }
  func.func @transform_2(%arg0: i32) -> (i32, i32) {
    %c0_i32 = arith.constant 0 : i32
    %c0_i32_0 = arith.constant 0 : i32
    %c0_i32_1 = arith.constant 0 : i32
    return %c0_i32, %c0_i32_0 : i32, i32
  }
  func.func @transform_3(%arg0: i32) -> (i32, i32) {
    %c0_i32 = arith.constant 0 : i32
    %c0_i32_0 = arith.constant 0 : i32
    %c0_i32_1 = arith.constant 0 : i32
    return %c0_i32, %c0_i32_0 : i32, i32
  }
  func.func @transform_4(%arg0: i32) -> (i32, i32) {
    %c0_i32 = arith.constant 0 : i32
    %c0_i32_0 = arith.constant 0 : i32
    return %arg0, %c0_i32 : i32, i32
  }
}

</mosaic_0001>

<llo_original>
// kernel: tpu_custom_call.1
$region0: #{tpu_custom_call.1}
  #allocation0 [shape = 'u32[]', space=smem, size = 0x4, offset = 0x4, fixed_abs, tag = 'smem constant byte address 0x4 - core index']
  #allocation1 [shape = 'u32[144,128]{1,0:T(1,128)}', space=vmem, size = 0x12000, scoped, tag = 'internal scratch']
  %s0 = inlined_call_operand.hbm [shape: f32[4,128], index: 0, kind: input, shape index: {}]
  %s1 = inlined_call_operand.vmem [shape: f32[1,128], index: 1, kind: input, shape index: {}]
  %s2 = inlined_call_operand.vmem [shape: f32[1,128], index: 2, kind: input, shape index: {}]
  %s3 = inlined_call_operand.hbm [shape: f32[128,128], index: 3, kind: input, shape index: {}]
  %s4 = inlined_call_operand.hbm [shape: f32[4,128], index: 4, kind: output, shape index: {}]
  %s5 = sld [smem:[#allocation0]]
  $region34: #{tpu_custom_call.1} parent=0
    _
  %s7 = ssub.s32 1, %s5
  %s8 = scalar_select 0, %s7, %s5
  $region1: #{tpu_custom_call.1} parent=0
    #allocation2 [shape = 'u8[2048]{0}', space=vmem, size = 0x800, scoped, tag = 'input window, operand 0, single buffered']
    #allocation3 [shape = 's32[1]{0}', space=sflag, size = 0x4, scoped, tag = 'scoped memory for tpu_custom_call.1']
    #allocation4 [shape = 's32[1]{0}', space=sflag, size = 0x4, scoped, tag = 'scoped memory for tpu_custom_call.1']
    #allocation5 [shape = 'u8[65536]{0}', space=vmem, size = 0x10000, scoped, tag = 'input window, operand 3, single buffered']
    #allocation6 [shape = 's32[1]{0}', space=sflag, size = 0x4, scoped, tag = 'scoped memory for tpu_custom_call.1']
    #allocation7 [shape = 'u8[2048]{0}', space=vmem, size = 0x800, scoped, tag = 'output window, operand 0, single buffered']
    %9 = vsyncpa [#allocation3], 0
    %10 = vsyncpa [#allocation6], 0
    %11 = vsyncpa [#allocation4], 0
    // Predicated region
    $region2: #{tpu_custom_call.1} parent=1 // pred_check
      _
    $region3: #{tpu_custom_call.1} parent=1 // pred_check_branch
      %13 = sbr.rel (0) target = $region5
    $region4: #{tpu_custom_call.1} parent=1 // pred_region
      %s15 = ssub.s32 64, 64
      %16 = vsyncadd [#allocation3], %s15
      %s18 = sshll.u32 [#allocation2], 4
      %s19 = int_to_ptr.vmem [resolvable:$true] %s18
      %21 = dma.hbm_to_vmem [thread:$0]  %s0, 64, %s19, [#allocation3]
    $region5: #{tpu_custom_call.1} parent=1 // pred_fallthru
      _
    // Predicated region
    $region6: #{tpu_custom_call.1} parent=1 // pred_check
      _
    $region7: #{tpu_custom_call.1} parent=1 // pred_check_branch
      %23 = sbr.rel (0) target = $region9
    $region8: #{tpu_custom_call.1} parent=1 // pred_region
      _
    $region9: #{tpu_custom_call.1} parent=1 // pred_fallthru
      _
    // Predicated region
    $region10: #{tpu_custom_call.1} parent=1 // pred_check
      _
    $region11: #{tpu_custom_call.1} parent=1 // pred_check_branch
      %25 = sbr.rel (0) target = $region13
    $region12: #{tpu_custom_call.1} parent=1 // pred_region
      _
    $region13: #{tpu_custom_call.1} parent=1 // pred_fallthru
      _
    // Predicated region
    $region14: #{tpu_custom_call.1} parent=1 // pred_check
      _
    $region15: #{tpu_custom_call.1} parent=1 // pred_check_branch
      %27 = sbr.rel (0) target = $region17
    $region16: #{tpu_custom_call.1} parent=1 // pred_region
      %s29 = ssub.s32 2048, 2048
      %30 = vsyncadd [#allocation6], %s29
      %s31 = sshll.u32 [#allocation5], 4
      %s32 = int_to_ptr.vmem [resolvable:$true] %s31
      %37 = dma.hbm_to_vmem [thread:$0]  %s3, 2048, %s32, [#allocation6], 128, 128, 8
    $region17: #{tpu_custom_call.1} parent=1 // pred_fallthru
      _
    // Predicated region
    $region18: #{tpu_custom_call.1} parent=1 // pred_check
      _
    $region19: #{tpu_custom_call.1} parent=1 // pred_check_branch
      %39 = sbr.rel (0) target = $region21
    $region20: #{tpu_custom_call.1} parent=1 // pred_region
      %40 = dma.done [#allocation3], 64
    $region21: #{tpu_custom_call.1} parent=1 // pred_fallthru
      _
    // Predicated region
    $region22: #{tpu_custom_call.1} parent=1 // pred_check
      _
    $region23: #{tpu_custom_call.1} parent=1 // pred_check_branch
      %42 = sbr.rel (0) target = $region25
    $region24: #{tpu_custom_call.1} parent=1 // pred_region
      %43 = dma.done [#allocation6], 2048
    $region25: #{tpu_custom_call.1} parent=1 // pred_fallthru
      _
    %v44 = vld [vmem:[#allocation2] sm:$0xf]
    %v45 = vld [vmem:[#allocation5] sm:$0xff]
    %v46 = vld [vmem:[#allocation5 + $0x8] sm:$0xff]
    %v47 = vld [vmem:[#allocation5 + $0x10] sm:$0xff]
    %v48 = vld [vmem:[#allocation5 + $0x18] sm:$0xff]
    %v49 = vld [vmem:[#allocation5 + $0x20] sm:$0xff]
    %v50 = vld [vmem:[#allocation5 + $0x28] sm:$0xff]
    %v51 = vld [vmem:[#allocation5 + $0x30] sm:$0xff]
    %v52 = vld [vmem:[#allocation5 + $0x38] sm:$0xff]
    %v53 = vld [vmem:[#allocation5 + $0x40] sm:$0xff]
    %v54 = vld [vmem:[#allocation5 + $0x48] sm:$0xff]
    %v55 = vld [vmem:[#allocation5 + $0x50] sm:$0xff]
    %v56 = vld [vmem:[#allocation5 + $0x58] sm:$0xff]
    %v57 = vld [vmem:[#allocation5 + $0x60] sm:$0xff]
    %v58 = vld [vmem:[#allocation5 + $0x68] sm:$0xff]
    %v59 = vld [vmem:[#allocation5 + $0x70] sm:$0xff]
    %v60 = vld [vmem:[#allocation5 + $0x78] sm:$0xff]
    %61 = vmatprep.subr.mxu0 0.0
    %62 = vmatpush1.msra.mxu0 %v60
    %63 = vmatprep.subr.mxu0 0.0
    %64 = vmatpush1.msra.mxu0 %v59
    %65 = vmatprep.subr.mxu0 0.0
    %66 = vmatpush1.msra.mxu0 %v58
    %67 = vmatprep.subr.mxu0 0.0
    %68 = vmatpush1.msra.mxu0 %v57
    %69 = vmatprep.subr.mxu0 0.0
    %70 = vmatpush1.msra.mxu0 %v56
    %71 = vmatprep.subr.mxu0 0.0
    %72 = vmatpush1.msra.mxu0 %v55
    %73 = vmatprep.subr.mxu0 0.0
    %74 = vmatpush1.msra.mxu0 %v54
    %75 = vmatprep.subr.mxu0 0.0
    %76 = vmatpush1.msra.mxu0 %v53
    %77 = vmatprep.subr.mxu0 0.0
    %78 = vmatpush1.msra.mxu0 %v52
    %79 = vmatprep.subr.mxu0 0.0
    %80 = vmatpush1.msra.mxu0 %v51
    %81 = vmatprep.subr.mxu0 0.0
    %82 = vmatpush1.msra.mxu0 %v50
    %83 = vmatprep.subr.mxu0 0.0
    %84 = vmatpush1.msra.mxu0 %v49
    %85 = vmatprep.subr.mxu0 0.0
    %86 = vmatpush1.msra.mxu0 %v48
    %87 = vmatprep.subr.mxu0 0.0
    %88 = vmatpush1.msra.mxu0 %v47
    %89 = vmatprep.subr.mxu0 0.0
    %90 = vmatpush1.msra.mxu0 %v46
    %91 = vmatprep.subr.mxu0 0.0
    %92 = vmatpush1.msra.mxu0 %v45
    %93 = vmatprep.subr.mxu0 0.0
    %94 = vmatpush2.msra.mxu0 0.0
    %95 = vmatprep.subr.mxu0 0.0
    %96 = vmatpush2.msra.mxu0 0.0
    %97 = vmatprep.subr.mxu0 0.0
    %98 = vmatpush2.msra.mxu0 0.0
    %99 = vmatprep.subr.mxu0 0.0
    %100 = vmatpush2.msra.mxu0 0.0
    %101 = vmatprep.subr.mxu0 0.0
    %102 = vmatpush2.msra.mxu0 0.0
    %103 = vmatprep.subr.mxu0 0.0
    %104 = vmatpush2.msra.mxu0 0.0
    %105 = vmatprep.subr.mxu0 0.0
    %106 = vmatpush2.msra.mxu0 0.0
    %107 = vmatprep.subr.mxu0 0.0
    %108 = vmatpush2.msra.mxu0 0.0
    %109 = vmatprep.subr.mxu0 0.0
    %110 = vmatpush2.msra.mxu0 0.0
    %111 = vmatprep.subr.mxu0 0.0
    %112 = vmatpush2.msra.mxu0 0.0
    %113 = vmatprep.subr.mxu0 0.0
    %114 = vmatpush2.msra.mxu0 0.0
    %115 = vmatprep.subr.mxu0 0.0
    %116 = vmatpush2.msra.mxu0 0.0
    %117 = vmatprep.subr.mxu0 0.0
    %118 = vmatpush2.msra.mxu0 0.0
    %119 = vmatprep.subr.mxu0 0.0
    %120 = vmatpush2.msra.mxu0 0.0
    %121 = vmatprep.subr.mxu0 0.0
    %122 = vmatpush2.msra.mxu0 0.0
    %123 = vmatprep.subr.mxu0 0.0
    %124 = vmatpush2.msra.mxu0 0.0
    %125 = vmatprep.mubr.f32.mxu0 0.0
    %126 = vmatmul.mubr.f32.gmra.mxu0 %v44
    %v127 = vpop.f32.mrf.mxu0
    %v128 = vadd.f32 0.0, %v127
    %v129 = vpop.f32.mrf.mxu0
    %130 = vdwg.mxu0
    %v131 = vsub.f32 %v44, %v128
    %v132 = vmul.f32 %v131, %v131
    %133 = vmatprep.subr.mxu0 0.0
    %134 = vmatpush1.msra.mxu0 %v60
    %135 = vmatprep.subr.mxu0 0.0
    %136 = vmatpush1.msra.mxu0 %v59
    %137 = vmatprep.subr.mxu0 0.0
    %138 = vmatpush1.msra.mxu0 %v58
    %139 = vmatprep.subr.mxu0 0.0
    %140 = vmatpush1.msra.mxu0 %v57
    %141 = vmatprep.subr.mxu0 0.0
    %142 = vmatpush1.msra.mxu0 %v56
    %143 = vmatprep.subr.mxu0 0.0
    %144 = vmatpush1.msra.mxu0 %v55
    %145 = vmatprep.subr.mxu0 0.0
    %146 = vmatpush1.msra.mxu0 %v54
    %147 = vmatprep.subr.mxu0 0.0
    %148 = vmatpush1.msra.mxu0 %v53
    %149 = vmatprep.subr.mxu0 0.0
    %150 = vmatpush1.msra.mxu0 %v52
    %151 = vmatprep.subr.mxu0 0.0
    %152 = vmatpush1.msra.mxu0 %v51
    %153 = vmatprep.subr.mxu0 0.0
    %154 = vmatpush1.msra.mxu0 %v50
    %155 = vmatprep.subr.mxu0 0.0
    %156 = vmatpush1.msra.mxu0 %v49
    %157 = vmatprep.subr.mxu0 0.0
    %158 = vmatpush1.msra.mxu0 %v48
    %159 = vmatprep.subr.mxu0 0.0
    %160 = vmatpush1.msra.mxu0 %v47
    %161 = vmatprep.subr.mxu0 0.0
    %162 = vmatpush1.msra.mxu0 %v46
    %163 = vmatprep.subr.mxu0 0.0
    %164 = vmatpush1.msra.mxu0 %v45
    %165 = vmatprep.subr.mxu0 0.0
    %166 = vmatpush2.msra.mxu0 0.0
    %167 = vmatprep.subr.mxu0 0.0
    %168 = vmatpush2.msra.mxu0 0.0
    %169 = vmatprep.subr.mxu0 0.0
    %170 = vmatpush2.msra.mxu0 0.0
    %171 = vmatprep.subr.mxu0 0.0
    %172 = vmatpush2.msra.mxu0 0.0
    %173 = vmatprep.subr.mxu0 0.0
    %174 = vmatpush2.msra.mxu0 0.0
    %175 = vmatprep.subr.mxu0 0.0
    %176 = vmatpush2.msra.mxu0 0.0
    %177 = vmatprep.subr.mxu0 0.0
    %178 = vmatpush2.msra.mxu0 0.0
    %179 = vmatprep.subr.mxu0 0.0
    %180 = vmatpush2.msra.mxu0 0.0
    %181 = vmatprep.subr.mxu0 0.0
    %182 = vmatpush2.msra.mxu0 0.0
    %183 = vmatprep.subr.mxu0 0.0
    %184 = vmatpush2.msra.mxu0 0.0
    %185 = vmatprep.subr.mxu0 0.0
    %186 = vmatpush2.msra.mxu0 0.0
    %187 = vmatprep.subr.mxu0 0.0
    %188 = vmatpush2.msra.mxu0 0.0
    %189 = vmatprep.subr.mxu0 0.0
    %190 = vmatpush2.msra.mxu0 0.0
    %191 = vmatprep.subr.mxu0 0.0
    %192 = vmatpush2.msra.mxu0 0.0
    %193 = vmatprep.subr.mxu0 0.0
    %194 = vmatpush2.msra.mxu0 0.0
    %195 = vmatprep.subr.mxu0 0.0
    %196 = vmatpush2.msra.mxu0 0.0
    %197 = vmatprep.mubr.f32.mxu0 0.0
    %198 = vmatmul.mubr.f32.gmra.mxu0 %v132
    %v199 = vpop.f32.mrf.mxu0
    %v200 = vadd.f32 1e-05, %v199
    %v201 = vpop.f32.mrf.mxu0
    %202 = vdwg.mxu0
    %v203 = vrsqrt.pop %v200
    %v204 = vld [vmem:[%s1] sm:$0x1]
    %v206 = vlaneseq
    %v207 = vshrl.u32 %v206, 7
    %v208 = vsub.s32 0, %v207
    %v209 = vrot.slane %v204, %v208
    %v211 = vmul.f32 %v203, %v209
    %v212 = vmul.f32 %v131, %v211
    %v213 = vld [vmem:[%s2] sm:$0x1]
    %v215 = vlaneseq
    %v216 = vshrl.u32 %v215, 7
    %v217 = vsub.s32 0, %v216
    %v218 = vrot.slane %v213, %v217
    %v220 = vadd.f32 %v212, %v218
    %221 = vst [vmem:[#allocation7] sm:$0xf] %v220
    // Predicated region
    $region26: #{tpu_custom_call.1} parent=1 // pred_check
      _
    $region27: #{tpu_custom_call.1} parent=1 // pred_check_branch
      %223 = sbr.rel (0) target = $region29
    $region28: #{tpu_custom_call.1} parent=1 // pred_region
      %s225 = ssub.s32 64, 64
      %226 = vsyncadd [#allocation4], %s225
      %s228 = sshll.u32 [#allocation7], 4
      %s229 = int_to_ptr.vmem [resolvable:$true] %s228
      %231 = dma.vmem_to_hbm [thread:$0]  %s229, 64, %s4, [#allocation4]
    $region29: #{tpu_custom_call.1} parent=1 // pred_fallthru
      _
    // Predicated region
    $region30: #{tpu_custom_call.1} parent=1 // pred_check
      _
    $region31: #{tpu_custom_call.1} parent=1 // pred_check_branch
      %233 = sbr.rel (0) target = $region33
    $region32: #{tpu_custom_call.1} parent=1 // pred_region
      %234 = dma.done [#allocation4], 64
    $region33: #{tpu_custom_call.1} parent=1 // pred_fallthru
      _
    %235 = vsyncpa [#allocation3], 1
    %236 = vsyncpa [#allocation6], 1
    %237 = vsyncpa [#allocation4], 1

</llo_original>
